<compile_context>
chip_gen: v6e
topology: v6e:2x2x1
jax: 0.10.0
libtpu: 0.0.40
codegen_flags: <defaults>
</compile_context>

<pallas_src>
import functools
import math

import jax
import jax.numpy as jnp
from jax.experimental import pallas as pl
from jax.experimental.pallas import tpu as pltpu


# ----------------------------- fused Pallas kernel ---------------------------

def fused_cnn_kernel(x_ref, w_ref, bc_ref, mask_ref, wf_ref, lb_ref, out_ref,
                     *, H, W, C, Cout, K, B):
    """Conv3x3(pad=1)+bias+ReLU+MaxPool2d(2)+Flatten+Linear for B images.

    x_ref:    [B, C, (H+2)*W + 2]  row-padded, row-major-flattened images
                                   (C = Cin zero-padded to a multiple of 8)
    w_ref:    [Cout, 9*C]          conv weight, tap-major columns
    bc_ref:   [Cout, 1]            conv bias
    mask_ref: [2, H*W]             left / right zero-pad lane masks (kw=0 / kw=2)
    wf_ref:   [K, Cout, H*W]       linear weight with pool compaction folded in
    lb_ref:   [K, 1]               linear bias
    out_ref:  [K, B]               logits (class-major, batch on lanes)
    """
    HW = H * W
    T = B * HW

    mask_l = mask_ref[0:1, :]        # zero where output col == 0    (kw = 0 taps)
    mask_r = mask_ref[1:2, :]        # zero where output col == W-1  (kw = 2 taps)

    imgs = [x_ref[b] for b in range(B)]                    # each [C, L]

    # ---- stack the 9 shifted taps of all B images: [9*C, B*HW] --------------
    # flat input index for output pixel f and tap (kh, kw) is f + kh*W + kw;
    # the single left-pad element absorbs the kw-1 offset.
    tap_stacks = []
    for kh in range(3):
        for kw in range(3):
            start = kh * W + kw
            pieces = []
            for b in range(B):
                xs = imgs[b][:, start:start + HW]           # [C, HW] flat shift
                if kw == 0:
                    xs = xs * mask_l
                elif kw == 2:
                    xs = xs * mask_r
                pieces.append(xs)
            tap_stacks.append(pieces[0] if B == 1
                              else jnp.concatenate(pieces, axis=1))  # [C, B*HW]
    xstack = jnp.concatenate(tap_stacks, axis=0)            # [9*C, B*HW]

    # ---- Conv2d(3x3, pad=1) as ONE fused matmul + bias + ReLU ---------------
    y = jnp.dot(w_ref[...], xstack, preferred_element_type=jnp.float32)
    y = jnp.maximum(y + bc_ref[...], 0.0)                   # [Cout, B*HW]

    # ---- MaxPool2d(2) via two shift+max passes (XLU roll, VPU max) ----------
    # roll by T-1 == roll by -1 : element f picks up f+1 (right neighbour);
    # roll by T-W == roll by -W : element f picks up f+W (row below).
    # Wrap-around only contaminates odd-row / odd-col positions, which the
    # folded linear weight zeroes out.
    h = jnp.maximum(y, pltpu.roll(y, T - 1, axis=1))
    v = jnp.maximum(h, pltpu.roll(h, T - W, axis=1))        # window max at (even,even)

    # ---- pool compaction + Flatten + Linear, folded into wf -----------------
    # logits[k, b] = sum_{c,f} v[c, b*HW + f] * wf[k, c, f] + lb[k]
    rows = []
    for k in range(K):
        wfk = wf_ref[k]                                     # [Cout, HW]
        cols = []
        for b in range(B):
            vb = v[:, b * HW:(b + 1) * HW]                  # lane-aligned slice
            s = jnp.sum(vb * wfk, axis=1, keepdims=True)    # [Cout, 1] lane reduce
            cols.append(jnp.sum(s, axis=0, keepdims=True))  # [1, 1]
        rows.append(cols[0] if B == 1 else jnp.concatenate(cols, axis=1))  # [1, B]
    logits = rows[0] if K == 1 else jnp.concatenate(rows, axis=0)          # [K, B]
    out_ref[...] = logits + lb_ref[...]


# ------------------------------ host wrapper --------------------------------

def _pick_block_batch(n, max_b=8):
    """Largest B <= max_b dividing n while keeping >= 2 grid steps (megacore)."""
    best = 1
    for b in range(1, min(n, max_b) + 1):
        if n % b == 0 and (n // b >= 2 or n == 1):
            best = b
    return best


@jax.jit
def cnn_forward(x, conv_w, conv_b, lin_w, lin_b):
    """x: [N, Cin, H, W] (NCHW, float32) -> logits [N, num_classes]."""
    N, Cin, H, W = x.shape
    assert H % 2 == 0 and W % 2 == 0
    Cout = conv_w.shape[0]
    Hp, Wp = H // 2, W // 2
    K = lin_w.shape[0]
    HW = H * W
    L = (H + 2) * W + 2
    Cp = ((Cin + 7) // 8) * 8            # pad channels so sublane concat is aligned
    B = _pick_block_batch(N)
    G = N // B

    # Row-pad, flatten row-major, pad 1 element each end, zero-pad channels:
    # every (kh, kw) tap is then a pure flat shift inside the kernel.
    xv = jnp.pad(x, ((0, 0), (0, 0), (1, 1), (0, 0)))            # [N, Cin, H+2, W]
    xf = jnp.pad(xv.reshape(N, Cin, (H + 2) * W),
                 ((0, 0), (0, Cp - Cin), (1, 1)))                # [N, Cp, L]

    # --- input-independent weight relayouts (hoist to load time in a real model)
    # conv: tap-major [Cout, 9*Cp] so all 9 taps fuse into one matmul.
    w_pad = jnp.pad(conv_w, ((0, 0), (0, Cp - Cin), (0, 0), (0, 0)))
    w9c = w_pad.transpose(0, 2, 3, 1).reshape(Cout, 9 * Cp)      # [Cout, 9*Cp]
    bc = conv_b.reshape(Cout, 1)
    # linear: fold the 2x2-pool compaction into the weight -> [K, Cout, HW]
    # (value for pooled pixel (py, px) sits at conv pixel (2*py, 2*px)).
    lw4 = lin_w.reshape(K, Cout, Hp, Wp)
    wf = jnp.zeros((K, Cout, H, W), lin_w.dtype).at[:, :, ::2, ::2].set(lw4)
    wf = wf.reshape(K, Cout, HW)
    lb = lin_b.reshape(K, 1)
    # horizontal zero-pad lane masks for the kw=0 / kw=2 taps (precomputed).
    col = jnp.arange(HW, dtype=jnp.int32) % W
    masks = jnp.stack([(col != 0).astype(jnp.float32),
                       (col != W - 1).astype(jnp.float32)])      # [2, HW]

    kernel = functools.partial(fused_cnn_kernel,
                               H=H, W=W, C=Cp, Cout=Cout, K=K, B=B)

    out3 = pl.pallas_call(
        kernel,
        out_shape=jax.ShapeDtypeStruct((G, K, B), jnp.float32),
        grid=(G,),
        in_specs=[
            pl.BlockSpec((B, Cp, L), lambda g: (g, 0, 0)),
            pl.BlockSpec((Cout, 9 * Cp), lambda g: (0, 0)),
            pl.BlockSpec((Cout, 1), lambda g: (0, 0)),
            pl.BlockSpec((2, HW), lambda g: (0, 0)),
            pl.BlockSpec((K, Cout, HW), lambda g: (0, 0, 0)),
            pl.BlockSpec((K, 1), lambda g: (0, 0)),
        ],
        out_specs=pl.BlockSpec((None, K, B), lambda g: (g, 0, 0)),
        compiler_params=pltpu.CompilerParams(
            dimension_semantics=("parallel",)),
    )(xf, w9c, bc, masks, wf, lb)

    # (G, K, B) -> (N, K); image index is g*B + b.
    return out3.transpose(0, 2, 1).reshape(N, K)


# ------------------------------ pure-JAX reference ---------------------------

def cnn_reference(x, conv_w, conv_b, lin_w, lin_b):
    y = jax.lax.conv_general_dilated(
        x, conv_w, window_strides=(1, 1), padding=((1, 1), (1, 1)),
        dimension_numbers=("NCHW", "OIHW", "NCHW"),
        precision=jax.lax.Precision.HIGHEST)
    y = jnp.maximum(y + conv_b[None, :, None, None], 0.0)
    N_, C_, H_, W_ = y.shape
    y = y.reshape(N_, C_, H_ // 2, 2, W_ // 2, 2).max(axis=(3, 5))
    feat = y.reshape(N_, -1)                                   # torch flatten order
    return jnp.dot(feat, lin_w.T, precision=jax.lax.Precision.HIGHEST) + lin_b


# --------------------------------- main --------------------------------------

if __name__ == "__main__":
    # Small shapes consistent with the module structure.
    Cin, H, W = 3, 16, 16
    Cout, num_classes = 16, 2
    Hp, Wp = H // 2, W // 2

    key = jax.random.PRNGKey(0)
    kx, kcw, kcb, klw, klb, kx2 = jax.random.split(key, 6)

    # Deterministic, PyTorch-style (uniform +/- 1/sqrt(fan_in)) init.
    fan_conv = Cin * 3 * 3
    bc_ = 1.0 / math.sqrt(fan_conv)
    conv_w = jax.random.uniform(kcw, (Cout, Cin, 3, 3), jnp.float32, -bc_, bc_)
    conv_b = jax.random.uniform(kcb, (Cout,), jnp.float32, -bc_, bc_)

    fan_lin = Cout * Hp * Wp
    bl_ = 1.0 / math.sqrt(fan_lin)
    lin_w = jax.random.uniform(klw, (num_classes, Cout * Hp * Wp),
                               jnp.float32, -bl_, bl_)
    lin_b = jax.random.uniform(klb, (num_classes,), jnp.float32, -bl_, bl_)

    # Primary check: N=2 -> B=1 per step, grid=(2,) so both v7x TCs get work.
    x = jax.random.normal(kx, (2, Cin, H, W), jnp.float32)
    out = jax.block_until_ready(cnn_forward(x, conv_w, conv_b, lin_w, lin_b))
    ref = cnn_reference(x, conv_w, conv_b, lin_w, lin_b)
    assert out.shape == (2, num_classes)
    assert bool(jnp.all(jnp.isfinite(out)))
    assert bool(jnp.allclose(out, ref, rtol=2e-2, atol=2e-2)), (out, ref)

    # Batched-block check: N=8 -> B=4 images per grid step, grid=(2,).
    x2 = jax.random.normal(kx2, (8, Cin, H, W), jnp.float32)
    out2 = jax.block_until_ready(cnn_forward(x2, conv_w, conv_b, lin_w, lin_b))
    ref2 = cnn_reference(x2, conv_w, conv_b, lin_w, lin_b)
    assert out2.shape == (8, num_classes)
    assert bool(jnp.allclose(out2, ref2, rtol=2e-2, atol=2e-2)), (out2, ref2)

    print("KERNEL_OK")
</pallas_src>

<mosaic_0001>
module attributes {stable_mosaic.version = 11 : i64} {
  func.func @fused_cnn_kernel(%arg0: i32, %arg1: memref<1x8x290xf32, #tpu.memory_space<vmem>>, %arg2: memref<16x72xf32, #tpu.memory_space<vmem>>, %arg3: memref<16x1xf32, #tpu.memory_space<vmem>>, %arg4: memref<2x256xf32, #tpu.memory_space<vmem>>, %arg5: memref<2x16x256xf32, #tpu.memory_space<vmem>>, %arg6: memref<2x1xf32, #tpu.memory_space<vmem>>, %arg7: memref<1x2x1xf32, #tpu.memory_space<vmem>>) attributes {dimension_semantics = [#tpu.dimension_semantics<parallel>], iteration_bounds = array<i64: 2>, scalar_prefetch = 0 : i64, scratch_operands = 0 : i64, tpu.core_type = #tpu.core_type<tc>, window_params = [{transform_indices = @transform_0, window_bounds = array<i64: 1, 8, 290>}, {pipeline_mode = #tpu.pipeline_mode<synchronous>, transform_indices = @transform_1, window_bounds = array<i64: 16, 72>}, {pipeline_mode = #tpu.pipeline_mode<synchronous>, transform_indices = @transform_2, window_bounds = array<i64: 16, 1>}, {pipeline_mode = #tpu.pipeline_mode<synchronous>, transform_indices = @transform_3, window_bounds = array<i64: 2, 256>}, {pipeline_mode = #tpu.pipeline_mode<synchronous>, transform_indices = @transform_4, window_bounds = array<i64: 2, 16, 256>}, {pipeline_mode = #tpu.pipeline_mode<synchronous>, transform_indices = @transform_5, window_bounds = array<i64: 2, 1>}, {transform_indices = @transform_6, window_bounds = array<i64: 1, 2, 1>}]} {
    %c0 = arith.constant 0 : index
    %c0_0 = arith.constant 0 : index
    %0 = vector.load %arg4[%c0, %c0_0] : memref<2x256xf32, #tpu.memory_space<vmem>>, vector<1x256xf32>
    %c1 = arith.constant 1 : index
    %c0_1 = arith.constant 0 : index
    %1 = vector.load %arg4[%c1, %c0_1] : memref<2x256xf32, #tpu.memory_space<vmem>>, vector<1x256xf32>
    %c0_2 = arith.constant 0 : index
    %c0_3 = arith.constant 0 : index
    %c0_4 = arith.constant 0 : index
    %2 = vector.load %arg1[%c0_2, %c0_3, %c0_4] : memref<1x8x290xf32, #tpu.memory_space<vmem>>, vector<1x8x290xf32>
    %3 = vector.shape_cast %2 : vector<1x8x290xf32> to vector<8x290xf32>
    %4 = vector.extract_strided_slice %3 {offsets = [0, 0], sizes = [8, 256], strides = [1, 1]} : vector<8x290xf32> to vector<8x256xf32>
    %5 = vector.broadcast %0 : vector<1x256xf32> to vector<8x256xf32>
    %6 = arith.mulf %4, %5 : vector<8x256xf32>
    %7 = vector.extract_strided_slice %3 {offsets = [0, 1], sizes = [8, 256], strides = [1, 1]} : vector<8x290xf32> to vector<8x256xf32>
    %8 = vector.extract_strided_slice %3 {offsets = [0, 2], sizes = [8, 256], strides = [1, 1]} : vector<8x290xf32> to vector<8x256xf32>
    %9 = vector.broadcast %1 : vector<1x256xf32> to vector<8x256xf32>
    %10 = arith.mulf %8, %9 : vector<8x256xf32>
    %11 = vector.extract_strided_slice %3 {offsets = [0, 16], sizes = [8, 256], strides = [1, 1]} : vector<8x290xf32> to vector<8x256xf32>
    %12 = vector.broadcast %0 : vector<1x256xf32> to vector<8x256xf32>
    %13 = arith.mulf %11, %12 : vector<8x256xf32>
    %14 = vector.extract_strided_slice %3 {offsets = [0, 17], sizes = [8, 256], strides = [1, 1]} : vector<8x290xf32> to vector<8x256xf32>
    %15 = vector.extract_strided_slice %3 {offsets = [0, 18], sizes = [8, 256], strides = [1, 1]} : vector<8x290xf32> to vector<8x256xf32>
    %16 = vector.broadcast %1 : vector<1x256xf32> to vector<8x256xf32>
    %17 = arith.mulf %15, %16 : vector<8x256xf32>
    %18 = vector.extract_strided_slice %3 {offsets = [0, 32], sizes = [8, 256], strides = [1, 1]} : vector<8x290xf32> to vector<8x256xf32>
    %19 = vector.broadcast %0 : vector<1x256xf32> to vector<8x256xf32>
    %20 = arith.mulf %18, %19 : vector<8x256xf32>
    %21 = vector.extract_strided_slice %3 {offsets = [0, 33], sizes = [8, 256], strides = [1, 1]} : vector<8x290xf32> to vector<8x256xf32>
    %22 = vector.extract_strided_slice %3 {offsets = [0, 34], sizes = [8, 256], strides = [1, 1]} : vector<8x290xf32> to vector<8x256xf32>
    %23 = vector.broadcast %1 : vector<1x256xf32> to vector<8x256xf32>
    %24 = arith.mulf %22, %23 : vector<8x256xf32>
    %25 = tpu.concatenate %6, %7, %10, %13, %14, %17, %20, %21, %24 in 0 : vector<8x256xf32>, vector<8x256xf32>, vector<8x256xf32>, vector<8x256xf32>, vector<8x256xf32>, vector<8x256xf32>, vector<8x256xf32>, vector<8x256xf32>, vector<8x256xf32> -> vector<72x256xf32>
    %c0_5 = arith.constant 0 : index
    %c0_6 = arith.constant 0 : index
    %26 = vector.load %arg2[%c0_5, %c0_6] : memref<16x72xf32, #tpu.memory_space<vmem>>, vector<16x72xf32>
    %cst = arith.constant dense<0.000000e+00> : vector<16x256xf32>
    %27 = tpu.matmul %26, %25, %cst {dimension_numbers = #tpu.dot_dimension_numbers<[1], [0], [0], [1], [0, 0, 1, 1], [], []>} : vector<16x72xf32>, vector<72x256xf32>, vector<16x256xf32> -> vector<16x256xf32>
    %c0_7 = arith.constant 0 : index
    %c0_8 = arith.constant 0 : index
    %28 = vector.load %arg3[%c0_7, %c0_8] : memref<16x1xf32, #tpu.memory_space<vmem>>, vector<16x1xf32>
    %29 = vector.broadcast %28 : vector<16x1xf32> to vector<16x256xf32>
    %30 = arith.addf %27, %29 : vector<16x256xf32>
    %cst_9 = arith.constant 0.000000e+00 : f32
    %31 = vector.broadcast %cst_9 : f32 to vector<16x256xf32>
    %32 = arith.maximumf %30, %31 : vector<16x256xf32>
    %c255_i32 = arith.constant 255 : i32
    %33 = tpu.dynamic_rotate %32 by %c255_i32 dim 1 : vector<16x256xf32>, i32 -> vector<16x256xf32>
    %34 = arith.maximumf %32, %33 : vector<16x256xf32>
    %c240_i32 = arith.constant 240 : i32
    %35 = tpu.dynamic_rotate %34 by %c240_i32 dim 1 : vector<16x256xf32>, i32 -> vector<16x256xf32>
    %36 = arith.maximumf %34, %35 : vector<16x256xf32>
    %c0_10 = arith.constant 0 : index
    %c0_11 = arith.constant 0 : index
    %c0_12 = arith.constant 0 : index
    %37 = vector.load %arg5[%c0_10, %c0_11, %c0_12] : memref<2x16x256xf32, #tpu.memory_space<vmem>>, vector<1x16x256xf32>
    %38 = vector.shape_cast %37 : vector<1x16x256xf32> to vector<16x256xf32>
    %39 = arith.mulf %36, %38 : vector<16x256xf32>
    %cst_13 = arith.constant dense<0.000000e+00> : vector<16xf32>
    %40 = vector.multi_reduction <add>, %39, %cst_13 [1] : vector<16x256xf32> to vector<16xf32>
    %41 = vector.shape_cast %40 : vector<16xf32> to vector<16x1xf32>
    %cst_14 = arith.constant dense<0.000000e+00> : vector<1xf32>
    %42 = vector.multi_reduction <add>, %41, %cst_14 [0] : vector<16x1xf32> to vector<1xf32>
    %43 = vector.shape_cast %42 : vector<1xf32> to vector<1x1xf32>
    %c1_15 = arith.constant 1 : index
    %c0_16 = arith.constant 0 : index
    %c0_17 = arith.constant 0 : index
    %44 = vector.load %arg5[%c1_15, %c0_16, %c0_17] : memref<2x16x256xf32, #tpu.memory_space<vmem>>, vector<1x16x256xf32>
    %45 = vector.shape_cast %44 : vector<1x16x256xf32> to vector<16x256xf32>
    %46 = arith.mulf %36, %45 : vector<16x256xf32>
    %cst_18 = arith.constant dense<0.000000e+00> : vector<16xf32>
    %47 = vector.multi_reduction <add>, %46, %cst_18 [1] : vector<16x256xf32> to vector<16xf32>
    %48 = vector.shape_cast %47 : vector<16xf32> to vector<16x1xf32>
    %cst_19 = arith.constant dense<0.000000e+00> : vector<1xf32>
    %49 = vector.multi_reduction <add>, %48, %cst_19 [0] : vector<16x1xf32> to vector<1xf32>
    %50 = vector.shape_cast %49 : vector<1xf32> to vector<1x1xf32>
    %51 = tpu.concatenate %43, %50 in 0 : vector<1x1xf32>, vector<1x1xf32> -> vector<2x1xf32>
    %c0_20 = arith.constant 0 : index
    %c0_21 = arith.constant 0 : index
    %52 = vector.load %arg6[%c0_20, %c0_21] : memref<2x1xf32, #tpu.memory_space<vmem>>, vector<2x1xf32>
    %53 = arith.addf %51, %52 : vector<2x1xf32>
    %c0_22 = arith.constant 0 : index
    %c0_23 = arith.constant 0 : index
    %c0_24 = arith.constant 0 : index
    %54 = vector.load %arg7[%c0_22, %c0_23, %c0_24] : memref<1x2x1xf32, #tpu.memory_space<vmem>>, vector<1x2x1xf32>
    %55 = vector.shape_cast %54 : vector<1x2x1xf32> to vector<2x1xf32>
    %56 = vector.shape_cast %53 : vector<2x1xf32> to vector<1x2x1xf32>
    tpu.vector_store %arg7[%c0_22, %c0_23, %c0_24], %56 {strides = array<i32>} : memref<1x2x1xf32, #tpu.memory_space<vmem>>, vector<1x2x1xf32>,
    return
  }
  func.func @transform_0(%arg0: i32) -> (i32, i32, i32) {
    %c0_i32 = arith.constant 0 : i32
    %c0_i32_0 = arith.constant 0 : i32
    %c0_i32_1 = arith.constant 0 : i32
    return %arg0, %c0_i32, %c0_i32_0 : i32, i32, i32
  }
  func.func @transform_1(%arg0: i32) -> (i32, i32) {
    %c0_i32 = arith.constant 0 : i32
    %c0_i32_0 = arith.constant 0 : i32
    %c0_i32_1 = arith.constant 0 : i32
    return %c0_i32, %c0_i32_0 : i32, i32
  }
  func.func @transform_2(%arg0: i32) -> (i32, i32) {
    %c0_i32 = arith.constant 0 : i32
    %c0_i32_0 = arith.constant 0 : i32
    %c0_i32_1 = arith.constant 0 : i32
    return %c0_i32, %c0_i32_0 : i32, i32
  }
  func.func @transform_3(%arg0: i32) -> (i32, i32) {
    %c0_i32 = arith.constant 0 : i32
    %c0_i32_0 = arith.constant 0 : i32
    %c0_i32_1 = arith.constant 0 : i32
    return %c0_i32, %c0_i32_0 : i32, i32
  }
  func.func @transform_4(%arg0: i32) -> (i32, i32, i32) {
    %c0_i32 = arith.constant 0 : i32
    %c0_i32_0 = arith.constant 0 : i32
    %c0_i32_1 = arith.constant 0 : i32
    %c0_i32_2 = arith.constant 0 : i32
    return %c0_i32, %c0_i32_0, %c0_i32_1 : i32, i32, i32
  }
  func.func @transform_5(%arg0: i32) -> (i32, i32) {
    %c0_i32 = arith.constant 0 : i32
    %c0_i32_0 = arith.constant 0 : i32
    %c0_i32_1 = arith.constant 0 : i32
    return %c0_i32, %c0_i32_0 : i32, i32
  }
  func.func @transform_6(%arg0: i32) -> (i32, i32, i32) {
    %c0_i32 = arith.constant 0 : i32
    %c0_i32_0 = arith.constant 0 : i32
    %c0_i32_1 = arith.constant 0 : i32
    return %arg0, %c0_i32, %c0_i32_0 : i32, i32, i32
  }
}

</mosaic_0001>

<llo_original>
// kernel: cnn_forward.1
$region0: #{cnn_forward.1}
  #allocation0 [shape = 'u32[]', space=smem, size = 0x4, offset = 0x4, fixed_abs, tag = 'smem constant byte address 0x4 - core index']
  #allocation1 [shape = 'u32[144,128]{1,0:T(1,128)}', space=vmem, size = 0x12000, scoped, tag = 'internal scratch']
  %s0 = inlined_call_operand.vmem [shape: f32[2,8,290], index: 0, kind: input, shape index: {}]
  %s1 = inlined_call_operand.vmem [shape: f32[16,72], index: 1, kind: input, shape index: {}]
  %s2 = inlined_call_operand.vmem [shape: f32[16,1], index: 2, kind: input, shape index: {}]
  %s3 = inlined_call_operand.vmem [shape: f32[2,256], index: 3, kind: input, shape index: {}]
  %s4 = inlined_call_operand.vmem [shape: f32[2,16,256], index: 4, kind: input, shape index: {}]
  %s5 = inlined_call_operand.vmem [shape: f32[2,1], index: 5, kind: input, shape index: {}]
  %s6 = inlined_call_operand.vmem [shape: f32[2,2,1], index: 6, kind: output, shape index: {}]
  %s7 = sld [smem:[#allocation0]]
  $region57: #{cnn_forward.1} parent=0
    _
  %s9 = ssub.s32 1, %s7
  %s10 = scalar_select 0, %s9, %s7
  loop: start=0, step=1, limit=4
  $region2: #{cnn_forward.1} parent=0 // loop_pre_header
    _
  $region3: #{cnn_forward.1} parent=0 // loop_header
    %s12 = sphi 0, %s16
    %p13 = scmp.ge.s32.totalorder %s12, 4
    %s22 = sphi 0, %s24
    %s25 = sphi 0, %s22
    %s26 = sphi 0, %s25
    %s42 = sphi 0, %s26
    %s46 = sphi 0, %s46
    %s48 = sphi 0, %s46
    %s49 = sphi 0, %s48
    %s63 = sphi 0, %s49
    %s67 = sphi 0, %s67
    %s69 = sphi 0, %s67
    %s70 = sphi 0, %s69
    %s84 = sphi 0, %s70
    %s88 = sphi 0, %s88
    %s90 = sphi 0, %s88
    %s91 = sphi 0, %s90
    %s105 = sphi 0, %s91
    %s109 = sphi 0, %s109
    %s111 = sphi 0, %s109
    %s112 = sphi 0, %s111
    %s126 = sphi 0, %s112
    %s130 = sphi 0, %s130
    %s132 = sphi 0, %s130
    %s133 = sphi 0, %s132
    %s147 = sphi 0, %s133
    %s153 = sphi 0, %s155
    %s156 = sphi 0, %s153
    %s157 = sphi 0, %s156
    %s173 = sphi 0, %s157
  $region4: #{cnn_forward.1} parent=0 // loop_header_branch
    %15 = sbr.rel (%p13) target = $region8
  $region5: #{cnn_forward.1} parent=0 // loop_body
    %s17 = ssub.s32 %s12, 1
    %s18 = ssub.s32 %s12, 2
    %s19 = sadd.s32 %s12, 1
    %s20 = ssub.s32 %s12, %s19
    %p21 = scmp.eq.s32.totalorder %s20, 0
    %s23 = sadd.s32 %s22, 1
    %s24 = scalar_select %p21, %s22, %s23
    %p27 = pneg %p21
    %p28 = scmp.eq.s32.totalorder %s12, 1
    %p29 = por %p27, %p28
    %p30 = scmp.ne.s32.totalorder %s22, %s25
    %p31 = scmp.eq.s32.totalorder %s12, 0
    %p32 = por %p30, %p31
    %p33 = scmp.ne.s32.totalorder %s22, %s25
    %p34 = scmp.eq.s32.totalorder %s17, 1
    %p35 = por %p33, %p34
    %p36 = scmp.ne.s32.totalorder %s25, %s26
    %p37 = scmp.eq.s32.totalorder %s17, 0
    %p38 = por %p36, %p37
    %p39 = scmp.ne.s32.totalorder %s25, %s26
    %p40 = scmp.eq.s32.totalorder %s18, 1
    %p41 = por %p39, %p40
    %p43 = scmp.ne.s32.totalorder %s26, %s42
    %p44 = scmp.eq.s32.totalorder %s18, 0
    %p45 = por %p43, %p44
    %s47 = sadd.s32 %s46, 1
    %p50 = scmp.eq.s32.totalorder %s12, 1
    %p51 = scmp.ne.s32.totalorder %s46, %s48
    %p52 = scmp.eq.s32.totalorder %s12, 0
    %p53 = por %p51, %p52
    %p54 = scmp.ne.s32.totalorder %s46, %s48
    %p55 = scmp.eq.s32.totalorder %s17, 1
    %p56 = por %p54, %p55
    %p57 = scmp.ne.s32.totalorder %s48, %s49
    %p58 = scmp.eq.s32.totalorder %s17, 0
    %p59 = por %p57, %p58
    %p60 = scmp.ne.s32.totalorder %s48, %s49
    %p61 = scmp.eq.s32.totalorder %s18, 1
    %p62 = por %p60, %p61
    %p64 = scmp.ne.s32.totalorder %s49, %s63
    %p65 = scmp.eq.s32.totalorder %s18, 0
    %p66 = por %p64, %p65
    %s68 = sadd.s32 %s67, 1
    %p71 = scmp.eq.s32.totalorder %s12, 1
    %p72 = scmp.ne.s32.totalorder %s67, %s69
    %p73 = scmp.eq.s32.totalorder %s12, 0
    %p74 = por %p72, %p73
    %p75 = scmp.ne.s32.totalorder %s67, %s69
    %p76 = scmp.eq.s32.totalorder %s17, 1
    %p77 = por %p75, %p76
    %p78 = scmp.ne.s32.totalorder %s69, %s70
    %p79 = scmp.eq.s32.totalorder %s17, 0
    %p80 = por %p78, %p79
    %p81 = scmp.ne.s32.totalorder %s69, %s70
    %p82 = scmp.eq.s32.totalorder %s18, 1
    %p83 = por %p81, %p82
    %p85 = scmp.ne.s32.totalorder %s70, %s84
    %p86 = scmp.eq.s32.totalorder %s18, 0
    %p87 = por %p85, %p86
    %s89 = sadd.s32 %s88, 1
    %p92 = scmp.eq.s32.totalorder %s12, 1
    %p93 = scmp.ne.s32.totalorder %s88, %s90
    %p94 = scmp.eq.s32.totalorder %s12, 0
    %p95 = por %p93, %p94
    %p96 = scmp.ne.s32.totalorder %s88, %s90
    %p97 = scmp.eq.s32.totalorder %s17, 1
    %p98 = por %p96, %p97
    %p99 = scmp.ne.s32.totalorder %s90, %s91
    %p100 = scmp.eq.s32.totalorder %s17, 0
    %p101 = por %p99, %p100
    %p102 = scmp.ne.s32.totalorder %s90, %s91
    %p103 = scmp.eq.s32.totalorder %s18, 1
    %p104 = por %p102, %p103
    %p106 = scmp.ne.s32.totalorder %s91, %s105
    %p107 = scmp.eq.s32.totalorder %s18, 0
    %p108 = por %p106, %p107
    %s110 = sadd.s32 %s109, 1
    %p113 = scmp.eq.s32.totalorder %s12, 1
    %p114 = scmp.ne.s32.totalorder %s109, %s111
    %p115 = scmp.eq.s32.totalorder %s12, 0
    %p116 = por %p114, %p115
    %p117 = scmp.ne.s32.totalorder %s109, %s111
    %p118 = scmp.eq.s32.totalorder %s17, 1
    %p119 = por %p117, %p118
    %p120 = scmp.ne.s32.totalorder %s111, %s112
    %p121 = scmp.eq.s32.totalorder %s17, 0
    %p122 = por %p120, %p121
    %p123 = scmp.ne.s32.totalorder %s111, %s112
    %p124 = scmp.eq.s32.totalorder %s18, 1
    %p125 = por %p123, %p124
    %p127 = scmp.ne.s32.totalorder %s112, %s126
    %p128 = scmp.eq.s32.totalorder %s18, 0
    %p129 = por %p127, %p128
    %s131 = sadd.s32 %s130, 1
    %p134 = scmp.eq.s32.totalorder %s12, 1
    %p135 = scmp.ne.s32.totalorder %s130, %s132
    %p136 = scmp.eq.s32.totalorder %s12, 0
    %p137 = por %p135, %p136
    %p138 = scmp.ne.s32.totalorder %s130, %s132
    %p139 = scmp.eq.s32.totalorder %s17, 1
    %p140 = por %p138, %p139
    %p141 = scmp.ne.s32.totalorder %s132, %s133
    %p142 = scmp.eq.s32.totalorder %s17, 0
    %p143 = por %p141, %p142
    %p144 = scmp.ne.s32.totalorder %s132, %s133
    %p145 = scmp.eq.s32.totalorder %s18, 1
    %p146 = por %p144, %p145
    %p148 = scmp.ne.s32.totalorder %s133, %s147
    %p149 = scmp.eq.s32.totalorder %s18, 0
    %p150 = por %p148, %p149
    %s151 = ssub.s32 %s12, %s19
    %p152 = scmp.eq.s32.totalorder %s151, 0
    %s154 = sadd.s32 %s153, 1
    %s155 = scalar_select %p152, %s153, %s154
    %p158 = pneg %p152
    %p159 = scmp.eq.s32.totalorder %s12, 1
    %p160 = por %p158, %p159
    %p161 = scmp.ne.s32.totalorder %s153, %s156
    %p162 = scmp.eq.s32.totalorder %s12, 0
    %p163 = por %p161, %p162
    %p164 = scmp.ne.s32.totalorder %s153, %s156
    %p165 = scmp.eq.s32.totalorder %s17, 1
    %p166 = por %p164, %p165
    %p167 = scmp.ne.s32.totalorder %s156, %s157
    %p168 = scmp.eq.s32.totalorder %s17, 0
    %p169 = por %p167, %p168
    %p170 = scmp.ne.s32.totalorder %s156, %s157
    %p171 = scmp.eq.s32.totalorder %s18, 1
    %p172 = por %p170, %p171
    %p174 = scmp.ne.s32.totalorder %s157, %s173
    %p175 = scmp.eq.s32.totalorder %s18, 0
    %p176 = por %p174, %p175
    %p177 = scmp.le.s32.totalorder 1, %s12
    %p178 = scmp.lt.s32.totalorder %s12, 3
    %p179 = pnand %p177, %p178
    %p180 = pneg %p179
    // Predicated region
    $region9: #{cnn_forward.1} parent=5 // pred_check
      _
    $region10: #{cnn_forward.1} parent=5 // pred_check_branch
      %182 = sbr.rel (%p179) target = $region12
    $region11: #{cnn_forward.1} parent=5 // pred_region
      %s183 = ssub.s32 %s12, 1
      // Predicated region
      $region13: #{cnn_forward.1} parent=11 // pred_check
        %p184 = pneg %p59
      $region14: #{cnn_forward.1} parent=11 // pred_check_branch
        %186 = sbr.rel (%p184) target = $region16
      $region15: #{cnn_forward.1} parent=11 // pred_region
        _
      $region16: #{cnn_forward.1} parent=11 // pred_fallthru
        _
      // Predicated region
      $region17: #{cnn_forward.1} parent=11 // pred_check
        %p187 = pneg %p80
      $region18: #{cnn_forward.1} parent=11 // pred_check_branch
        %189 = sbr.rel (%p187) target = $region20
      $region19: #{cnn_forward.1} parent=11 // pred_region
        _
      $region20: #{cnn_forward.1} parent=11 // pred_fallthru
        _
      // Predicated region
      $region21: #{cnn_forward.1} parent=11 // pred_check
        %p190 = pneg %p101
      $region22: #{cnn_forward.1} parent=11 // pred_check_branch
        %192 = sbr.rel (%p190) target = $region24
      $region23: #{cnn_forward.1} parent=11 // pred_region
        _
      $region24: #{cnn_forward.1} parent=11 // pred_fallthru
        _
      // Predicated region
      $region25: #{cnn_forward.1} parent=11 // pred_check
        %p193 = pneg %p122
      $region26: #{cnn_forward.1} parent=11 // pred_check_branch
        %195 = sbr.rel (%p193) target = $region28
      $region27: #{cnn_forward.1} parent=11 // pred_region
        _
      $region28: #{cnn_forward.1} parent=11 // pred_fallthru
        _
      // Predicated region
      $region29: #{cnn_forward.1} parent=11 // pred_check
        %p196 = pneg %p143
      $region30: #{cnn_forward.1} parent=11 // pred_check_branch
        %198 = sbr.rel (%p196) target = $region32
      $region31: #{cnn_forward.1} parent=11 // pred_region
        _
      $region32: #{cnn_forward.1} parent=11 // pred_fallthru
        _
    $region12: #{cnn_forward.1} parent=5 // pred_fallthru
      _
    %p199 = scmp.lt.s32.totalorder %s12, 2
    // Predicated region
    $region33: #{cnn_forward.1} parent=5 // pred_check
      %p200 = pneg %p199
    $region34: #{cnn_forward.1} parent=5 // pred_check_branch
      %202 = sbr.rel (%p200) target = $region36
    $region35: #{cnn_forward.1} parent=5 // pred_region
      // Predicated region
      $region37: #{cnn_forward.1} parent=35 // pred_check
        %p203 = pneg %p32
      $region38: #{cnn_forward.1} parent=35 // pred_check_branch
        %205 = sbr.rel (%p203) target = $region40
      $region39: #{cnn_forward.1} parent=35 // pred_region
        %p206 = scmp.lt.s32.totalorder %s12, 1
        %s207 = scalar_select %p206, %s12, 1
        %s208 = smul.addr %s207, 3
        %s209 = smul.addr %s208, 8
        %s210 = scalar_lea.vmem %s0, %s209
      $region40: #{cnn_forward.1} parent=35 // pred_fallthru
        _
    $region36: #{cnn_forward.1} parent=5 // pred_fallthru
      _
    %p211 = scmp.le.s32.totalorder 1, %s12
    %p212 = scmp.lt.s32.totalorder %s12, 3
    %p213 = pnand %p211, %p212
    %p214 = pneg %p213
    // Predicated region
    $region41: #{cnn_forward.1} parent=5 // pred_check
      _
    $region42: #{cnn_forward.1} parent=5 // pred_check_branch
      %216 = sbr.rel (%p213) target = $region44
    $region43: #{cnn_forward.1} parent=5 // pred_region
      %s217 = ssub.s32 %s12, 1
      %p218 = scmp.lt.s32.totalorder %s17, 1
      %s219 = scalar_select %p218, %s17, 1
      %s220 = smul.addr %s219, 3
      %s221 = smul.addr %s220, 8
      %s222 = scalar_lea.vmem %s0, %s221
      %p223 = pneg %p38
      %p224 = pneg %p35
      %p225 = pneg %p59
      %p226 = pneg %p56
      %p227 = pneg %p80
      %p228 = pneg %p77
      %p229 = pneg %p101
      %p230 = pneg %p98
      %p231 = pneg %p122
      %p232 = pneg %p119
      %p233 = pneg %p143
      %p234 = pneg %p140
      %p235 = pneg %p169
      %p236 = pneg %p166
      %p237 = scmp.lt.s32.totalorder %s17, 1
      %s238 = scalar_select %p237, %s17, 1
      %s239 = smul.addr %s238, 2
      %s240 = scalar_lea.vmem %s6, %s239
      %p241 = scmp.lt.s32.totalorder %s17, 1
      %s242 = scalar_select %p241, %s17, 1
      %s243 = smul.addr %s242, 3
      %s244 = smul.addr %s243, 8
      %s245 = scalar_lea.vmem %s0, %s244
      %p246 = scmp.lt.s32.totalorder %s17, 1
      %s247 = scalar_select %p246, %s17, 1
      %s248 = smul.addr %s247, 2
      %s249 = scalar_lea.vmem %s6, %s248
      %v250 = vld [vmem:[%s3] ss:$2 sm:$0x3]
      %s251 = scalar_lea.vmem %s3, 1
      %v252 = vld [vmem:[%s251] ss:$2 sm:$0x3]
      %v253 = vld [vmem:[%s245] sm:$0xff]
      %v254 = vld [vmem:[%s245 + $0x8] sm:$0xff]
      %v255 = vld [vmem:[%s245 + $0x10] sm:$0xff]
      %v257 = vlaneseq
      %v258 = vshrl.u32 %v257, 7
      %v259 = vsub.s32 0, %v258
      %v260 = vrot.slane %v250, %v259
      %v261 = vlaneseq
      %v262 = vshrl.u32 %v261, 7
      %v263 = vsub.s32 1, %v262
      %v264 = vrot.slane %v250, %v263
      %v267 = vmul.f32 %v253, %v260
      %v268 = vmul.f32 %v254, %v264
      %v270 = vlaneseq
      %v271 = vshrl.u32 %v270, 7
      %v272 = vsub.s32 0, %v271
      %v273 = vrot.slane %v252, %v272
      %v274 = vlaneseq
      %v275 = vshrl.u32 %v274, 7
      %v276 = vsub.s32 1, %v275
      %v277 = vrot.slane %v252, %v276
      %278 = vrot.lane.b32.xlu0 %v273, 2
      %v279 = vpop.permute.xlu0 %278
      %280 = vrot.lane.b32.xlu0 %v277, 2
      %v281 = vpop.permute.xlu0 %280
      %vm282 = vcmask 15360
      %v283 = vsel %vm282, %v279, %v281
      %v287 = vmul.f32 %v253, %v279
      %v288 = vmul.f32 %v254, %v283
      %v289 = vmul.f32 %v255, %v281
      %290 = vrot.lane.b32.xlu0 %v260, 16
      %v291 = vpop.permute.xlu0 %290
      %292 = vrot.lane.b32.xlu0 %v264, 16
      %v293 = vpop.permute.xlu0 %292
      %vm294 = vcmask 130048
      %v295 = vsel %vm294, %v291, %v293
      %v299 = vmul.f32 %v253, %v291
      %v300 = vmul.f32 %v254, %v295
      %v301 = vmul.f32 %v255, %v293
      %302 = vrot.lane.b32.xlu0 %v273, 18
      %v303 = vpop.permute.xlu0 %302
      %304 = vrot.lane.b32.xlu0 %v277, 18
      %v305 = vpop.permute.xlu0 %304
      %vm306 = vcmask 146432
      %v307 = vsel %vm306, %v303, %v305
      %v311 = vmul.f32 %v253, %v303
      %v312 = vmul.f32 %v254, %v307
      %v313 = vmul.f32 %v255, %v305
      %314 = vrot.lane.b32.xlu0 %v260, 32
      %v315 = vpop.permute.xlu0 %314
      %316 = vrot.lane.b32.xlu0 %v264, 32
      %v317 = vpop.permute.xlu0 %316
      %vm318 = vcmask 261120
      %v319 = vsel %vm318, %v315, %v317
      %v323 = vmul.f32 %v253, %v315
      %v324 = vmul.f32 %v254, %v319
      %v325 = vmul.f32 %v255, %v317
      %326 = vrot.lane.b32.xlu0 %v273, 34
      %v327 = vpop.permute.xlu0 %326
      %328 = vrot.lane.b32.xlu0 %v277, 34
      %v329 = vpop.permute.xlu0 %328
      %vm330 = vcmask 277504
      %v331 = vsel %vm330, %v327, %v329
      %v335 = vmul.f32 %v253, %v327
      %v336 = vmul.f32 %v254, %v331
      %v337 = vmul.f32 %v255, %v329
      %341 = vrot.lane.b32.xlu0 %v253, 127
      %v342 = vpop.permute.xlu0 %341
      %343 = vrot.lane.b32.xlu0 %v254, 127
      %v344 = vpop.permute.xlu0 %343
      %345 = vrot.lane.b32.xlu0 %v255, 127
      %v346 = vpop.permute.xlu0 %345
      %vm347 = vcmask 1039360
      %v348 = vsel %vm347, %v342, %v344
      %v349 = vsel %vm347, %v344, %v346
      %355 = vrot.lane.b32.xlu0 %v287, 126
      %v356 = vpop.permute.xlu0 %355
      %357 = vrot.lane.b32.xlu0 %v288, 126
      %v358 = vpop.permute.xlu0 %357
      %359 = vrot.lane.b32.xlu0 %v289, 126
      %v360 = vpop.permute.xlu0 %359
      %vm361 = vcmask 1031168
      %v362 = vsel %vm361, %v356, %v358
      %v363 = vsel %vm361, %v358, %v360
      %369 = vrot.lane.b32.xlu0 %v299, 112
      %v370 = vpop.permute.xlu0 %369
      %371 = vrot.lane.b32.xlu0 %v300, 112
      %v372 = vpop.permute.xlu0 %371
      %373 = vrot.lane.b32.xlu0 %v301, 112
      %v374 = vpop.permute.xlu0 %373
      %vm375 = vcmask 916480
      %v376 = vsel %vm375, %v370, %v372
      %v377 = vsel %vm375, %v372, %v374
      %380 = vrot.lane.b32.xlu0 %v253, 111
      %v381 = vpop.permute.xlu0 %380
      %382 = vrot.lane.b32.xlu0 %v254, 111
      %v383 = vpop.permute.xlu0 %382
      %384 = vrot.lane.b32.xlu0 %v255, 111
      %v385 = vpop.permute.xlu0 %384
      %vm386 = vcmask 908288
      %v387 = vsel %vm386, %v381, %v383
      %v388 = vsel %vm386, %v383, %v385
      %394 = vrot.lane.b32.xlu0 %v311, 110
      %v395 = vpop.permute.xlu0 %394
      %396 = vrot.lane.b32.xlu0 %v312, 110
      %v397 = vpop.permute.xlu0 %396
      %398 = vrot.lane.b32.xlu0 %v313, 110
      %v399 = vpop.permute.xlu0 %398
      %vm400 = vcmask 900096
      %v401 = vsel %vm400, %v395, %v397
      %v402 = vsel %vm400, %v397, %v399
      %408 = vrot.lane.b32.xlu0 %v323, 96
      %v409 = vpop.permute.xlu0 %408
      %410 = vrot.lane.b32.xlu0 %v324, 96
      %v411 = vpop.permute.xlu0 %410
      %412 = vrot.lane.b32.xlu0 %v325, 96
      %v413 = vpop.permute.xlu0 %412
      %vm414 = vcmask 785408
      %v415 = vsel %vm414, %v409, %v411
      %v416 = vsel %vm414, %v411, %v413
      %419 = vrot.lane.b32.xlu0 %v253, 95
      %v420 = vpop.permute.xlu0 %419
      %421 = vrot.lane.b32.xlu0 %v254, 95
      %v422 = vpop.permute.xlu0 %421
      %423 = vrot.lane.b32.xlu0 %v255, 95
      %v424 = vpop.permute.xlu0 %423
      %vm425 = vcmask 777216
      %v426 = vsel %vm425, %v420, %v422
      %v427 = vsel %vm425, %v422, %v424
      %433 = vrot.lane.b32.xlu0 %v335, 94
      %v434 = vpop.permute.xlu0 %433
      %435 = vrot.lane.b32.xlu0 %v336, 94
      %v436 = vpop.permute.xlu0 %435
      %437 = vrot.lane.b32.xlu0 %v337, 94
      %v438 = vpop.permute.xlu0 %437
      %vm439 = vcmask 769024
      %v440 = vsel %vm439, %v434, %v436
      %v441 = vsel %vm439, %v436, %v438
      %v444 = vld [vmem:[%s1] sm:$0xff]
      %v445 = vld [vmem:[%s1 + $0x8] sm:$0xff]
      %v446 = vld [vmem:[%s2] sm:$0xff]
      %v447 = vld [vmem:[%s2 + $0x8] sm:$0xff]
      %449 = vset.pattern.permute.xlu0 0
      %450 = vperm.xlu0 %449, %v446
      %v451 = vpop.permute.xlu0 %450
      %454 = vset.pattern.permute.xlu0 0
      %455 = vperm.xlu0 %454, %v447
      %v456 = vpop.permute.xlu0 %455
      %vm458 = vcmask 588800
      %v460 = vsel %vm458, %v444, 0
      %v463 = vsel %vm458, %v445, 0
      %465 = vmatprep.subr.mxu0 0.0
      %466 = vmatpush1.msra.mxu0 0.0
      %467 = vmatprep.subr.mxu0 0.0
      %468 = vmatpush1.msra.mxu0 0.0
      %469 = vmatprep.subr.mxu0 0.0
      %470 = vmatpush1.msra.mxu0 0.0
      %471 = vmatprep.subr.mxu0 0.0
      %472 = vmatpush1.msra.mxu0 0.0
      %473 = vmatprep.subr.mxu0 0.0
      %474 = vmatpush1.msra.mxu0 0.0
      %475 = vmatprep.subr.mxu0 0.0
      %476 = vmatpush1.msra.mxu0 0.0
      %477 = vmatprep.subr.mxu0 0.0
      %478 = vmatpush1.msra.mxu0 0.0
      %479 = vmatprep.subr.mxu0 %v441
      %480 = vmatpush1.msra.mxu0 %v440
      %481 = vmatprep.subr.mxu0 %v427
      %482 = vmatpush1.msra.mxu0 %v426
      %483 = vmatprep.subr.mxu0 %v416
      %484 = vmatpush1.msra.mxu0 %v415
      %485 = vmatprep.subr.mxu0 %v402
      %486 = vmatpush1.msra.mxu0 %v401
      %487 = vmatprep.subr.mxu0 %v388
      %488 = vmatpush1.msra.mxu0 %v387
      %489 = vmatprep.subr.mxu0 %v377
      %490 = vmatpush1.msra.mxu0 %v376
      %491 = vmatprep.subr.mxu0 %v363
      %492 = vmatpush1.msra.mxu0 %v362
      %493 = vmatprep.subr.mxu0 %v349
      %494 = vmatpush1.msra.mxu0 %v348
      %495 = vmatprep.subr.mxu0 %v268
      %496 = vmatpush1.msra.mxu0 %v267
      %497 = vmatprep.subr.mxu0 0.0
      %498 = vmatpush2.msra.mxu0 0.0
      %499 = vmatprep.subr.mxu0 0.0
      %500 = vmatpush2.msra.mxu0 0.0
      %501 = vmatprep.subr.mxu0 0.0
      %502 = vmatpush2.msra.mxu0 0.0
      %503 = vmatprep.subr.mxu0 0.0
      %504 = vmatpush2.msra.mxu0 0.0
      %505 = vmatprep.subr.mxu0 0.0
      %506 = vmatpush2.msra.mxu0 0.0
      %507 = vmatprep.subr.mxu0 0.0
      %508 = vmatpush2.msra.mxu0 0.0
      %509 = vmatprep.subr.mxu0 0.0
      %510 = vmatpush2.msra.mxu0 0.0
      %511 = vmatprep.subr.mxu0 0.0
      %512 = vmatpush2.msra.mxu0 0.0
      %513 = vmatprep.subr.mxu0 0.0
      %514 = vmatpush2.msra.mxu0 0.0
      %515 = vmatprep.subr.mxu0 0.0
      %516 = vmatpush2.msra.mxu0 0.0
      %517 = vmatprep.subr.mxu0 0.0
      %518 = vmatpush2.msra.mxu0 0.0
      %519 = vmatprep.subr.mxu0 0.0
      %520 = vmatpush2.msra.mxu0 0.0
      %521 = vmatprep.subr.mxu0 0.0
      %522 = vmatpush2.msra.mxu0 0.0
      %523 = vmatprep.subr.mxu0 0.0
      %524 = vmatpush2.msra.mxu0 0.0
      %525 = vmatprep.subr.mxu0 0.0
      %526 = vmatpush2.msra.mxu0 0.0
      %527 = vmatprep.subr.mxu0 0.0
      %528 = vmatpush2.msra.mxu0 0.0
      %529 = vmatprep.mubr.f32.mxu0 0.0
      %530 = vmatmul.mubr.f32.gmra.mxu0 %v460
      %v531 = vpop.f32.mrf.mxu0
      %v532 = vadd.f32 %v451, %v531
      %v533 = vpop.f32.mrf.mxu0
      %v534 = vadd.f32 %v451, %v533
      %535 = vmatprep.mubr.f32.mxu0 0.0
      %536 = vmatmul.mubr.f32.gmra.mxu0 %v463
      %v537 = vpop.f32.mrf.mxu0
      %v538 = vadd.f32 %v456, %v537
      %v539 = vpop.f32.mrf.mxu0
      %v540 = vadd.f32 %v456, %v539
      %541 = vdwg.mxu0
      %v542 = vmax.f32 %v532, 0.0
      %v543 = vmax.f32 %v534, 0.0
      %v544 = vmax.f32 %v538, 0.0
      %v545 = vmax.f32 %v540, 0.0
      %546 = vrot.lane.b32.xlu0 %v542, 127
      %v547 = vpop.permute.xlu0 %546
      %548 = vrot.lane.b32.xlu0 %v544, 127
      %v549 = vpop.permute.xlu0 %548
      %550 = vrot.lane.b32.xlu0 %v543, 127
      %v551 = vpop.permute.xlu0 %550
      %552 = vrot.lane.b32.xlu0 %v545, 127
      %v553 = vpop.permute.xlu0 %552
      %v554 = vlaneseq
      %v555 = vand.u32 %v554, 127
      %vm556 = vcmp.lt.s32.totalorder %v555, 127
      %v557 = vsel %vm556, %v547, %v551
      %v558 = vsel %vm556, %v549, %v553
      %v559 = vsel %vm556, %v551, %v547
      %v560 = vsel %vm556, %v553, %v549
      %v561 = vmax.f32 %v542, %v557
      %v562 = vmax.f32 %v543, %v559
      %v563 = vmax.f32 %v544, %v558
      %v564 = vmax.f32 %v545, %v560
      %565 = vrot.lane.b32.xlu0 %v561, 112
      %v566 = vpop.permute.xlu0 %565
      %567 = vrot.lane.b32.xlu0 %v563, 112
      %v568 = vpop.permute.xlu0 %567
      %569 = vrot.lane.b32.xlu0 %v562, 112
      %v570 = vpop.permute.xlu0 %569
      %571 = vrot.lane.b32.xlu0 %v564, 112
      %v572 = vpop.permute.xlu0 %571
      %vm573 = vcmp.lt.s32.totalorder %v555, 112
      %v574 = vsel %vm573, %v566, %v570
      %v575 = vsel %vm573, %v568, %v572
      %v576 = vsel %vm573, %v570, %v566
      %v577 = vsel %vm573, %v572, %v568
      %v578 = vmax.f32 %v561, %v574
      %v579 = vmax.f32 %v562, %v576
      %v580 = vmax.f32 %v563, %v575
      %v581 = vmax.f32 %v564, %v577
      %v582 = vld [vmem:[%s4] sm:$0xff]
      %v583 = vld [vmem:[%s4 + $0x8] sm:$0xff]
      %v584 = vld [vmem:[%s4 + $0x10] sm:$0xff]
      %v585 = vld [vmem:[%s4 + $0x18] sm:$0xff]
      %v586 = vmul.f32 %v578, %v582
      %v587 = vmul.f32 %v579, %v583
      %v588 = vmul.f32 %v580, %v584
      %v589 = vmul.f32 %v581, %v585
      %v590 = vadd.f32 %v586, %v587
      %591 = vadd.xlane.f32.xlu0 %v590
      %v592 = vpop.xlane.xlu0 %591
      %v593 = vadd.f32 %v588, %v589
      %594 = vadd.xlane.f32.xlu0 %v593
      %v595 = vpop.xlane.xlu0 %594
      %v596 = vadd.f32 %v592, %v595
      %v597 = vrot.slane %v596, 4
      %v598 = vadd.f32 %v596, %v597
      %v599 = vrot.slane %v598, 2
      %v600 = vadd.f32 %v598, %v599
      %v601 = vrot.slane %v600, 1
      %v602 = vadd.f32 %v600, %v601
      %s603 = scalar_lea.vmem %s4, 32
      %v604 = vld [vmem:[%s603] sm:$0xff]
      %v605 = vld [vmem:[%s603 + $0x8] sm:$0xff]
      %v606 = vld [vmem:[%s603 + $0x10] sm:$0xff]
      %v607 = vld [vmem:[%s603 + $0x18] sm:$0xff]
      %v608 = vmul.f32 %v578, %v604
      %v609 = vmul.f32 %v579, %v605
      %v610 = vmul.f32 %v580, %v606
      %v611 = vmul.f32 %v581, %v607
      %v612 = vadd.f32 %v608, %v609
      %613 = vadd.xlane.f32.xlu0 %v612
      %v614 = vpop.xlane.xlu0 %613
      %v615 = vadd.f32 %v610, %v611
      %616 = vadd.xlane.f32.xlu0 %v615
      %v617 = vpop.xlane.xlu0 %616
      %v618 = vadd.f32 %v614, %v617
      %v619 = vrot.slane %v618, 4
      %v620 = vadd.f32 %v618, %v619
      %v621 = vrot.slane %v620, 2
      %v622 = vadd.f32 %v620, %v621
      %v623 = vrot.slane %v622, 1
      %v624 = vadd.f32 %v622, %v623
      %vm625 = vcmask 1040384
      %v626 = vsel %vm625, %v602, %v624
      %v627 = vld [vmem:[%s5] sm:$0x3]
      %v628 = vadd.f32 %v626, %v627
      %vm629 = vcmask 1024
      %630 = vst.msk [vmem:[%s249] sm:$0x3] %vm629, %v628
      %p631 = scmp.lt.s32.totalorder %s17, 1
      %s632 = scalar_select %p631, %s17, 1
      %s633 = smul.addr %s632, 2
      %s634 = scalar_lea.vmem %s6, %s633
      // Predicated region
      $region45: #{cnn_forward.1} parent=43 // pred_check
        %p635 = pneg %p166
      $region46: #{cnn_forward.1} parent=43 // pred_check_branch
        %637 = sbr.rel (%p635) target = $region48
      $region47: #{cnn_forward.1} parent=43 // pred_region
        _
      $region48: #{cnn_forward.1} parent=43 // pred_fallthru
        _
    $region44: #{cnn_forward.1} parent=5 // pred_fallthru
      _
    %p638 = scmp.le.s32.totalorder 2, %s12
    // Predicated region
    $region49: #{cnn_forward.1} parent=5 // pred_check
      %p639 = pneg %p638
    $region50: #{cnn_forward.1} parent=5 // pred_check_branch
      %641 = sbr.rel (%p639) target = $region52
    $region51: #{cnn_forward.1} parent=5 // pred_region
      %s642 = ssub.s32 %s12, 2
      // Predicated region
      $region53: #{cnn_forward.1} parent=51 // pred_check
        %p643 = pneg %p172
      $region54: #{cnn_forward.1} parent=51 // pred_check_branch
        %645 = sbr.rel (%p643) target = $region56
      $region55: #{cnn_forward.1} parent=51 // pred_region
        %p646 = scmp.lt.s32.totalorder %s18, 1
        %s647 = scalar_select %p646, %s18, 1
        %s648 = smul.addr %s647, 2
        %s649 = scalar_lea.vmem %s6, %s648
      $region56: #{cnn_forward.1} parent=51 // pred_fallthru
        _
    $region52: #{cnn_forward.1} parent=5 // pred_fallthru
      _
  $region6: #{cnn_forward.1} parent=0 // loop_footer
    %s16 = sadd.s32 1, %s12
  $region7: #{cnn_forward.1} parent=0 // loop_footer_branch
    %11 = sbr.rel target = $region3
  $region8: #{cnn_forward.1} parent=0 // loop_exit
    _

</llo_original>
